<compile_context>
chip_gen: v7x
topology: tpu7x:2x2x1
jax: 0.10.0
libtpu: 0.0.40
codegen_flags: <defaults>
</compile_context>

<pallas_src>
import functools

import jax
import jax.numpy as jnp
from jax.experimental import pallas as pl
from jax.experimental.pallas import tpu as pltpu


def _round_up(n, m):
    return ((n + m - 1) // m) * m


def _accumulate_and_write(dist, t, acc_ref, out_ref, *, batch, num_classes, tile_b):
    """Mask padded rows, accumulate per-row distances in VMEM, write the loss."""
    row = t * tile_b + jax.lax.broadcasted_iota(jnp.int32, (tile_b, 1), 0)
    dist = jnp.where(row < batch, dist, 0.0)          # padded batch rows -> 0
    acc_ref[...] += dist
    # Every masked-out (b, k != labels[b]) distmat entry contributes exactly
    # clamp(0) = 1e-12 in the PyTorch reference; add it analytically.
    masked_const = (jnp.float32(batch) * jnp.float32(num_classes - 1)
                    * jnp.float32(1e-12))
    out_ref[...] = ((jnp.sum(acc_ref[...], keepdims=True) + masked_const)
                    / jnp.float32(batch))


def _center_loss_resident_kernel(
    labels_ref,    # SMEM (B_pad,) int32   -- scalar prefetch
    x_ref,         # VMEM (tile_b, D)      -- auto-pipelined batch tile
    centers_ref,   # VMEM (C, D)           -- resident (constant index_map)
    out_ref,       # VMEM (1, 1) f32
    gath_ref,      # VMEM (tile_b, D) scratch, centers dtype
    acc_ref,       # VMEM (tile_b, 1) f32 scratch (vector accumulator)
    *, batch, num_classes, tile_b,
):
    t = pl.program_id(0)

    @pl.when(t == 0)
    def _():
        acc_ref[...] = jnp.zeros_like(acc_ref)

    # In-VMEM gather of the center rows selected by this tile's labels.
    # No per-row HBM DMA: just dynamic sublane slices of the resident table.
    def gather_row(r, carry):
        lab = labels_ref[t * tile_b + r]
        lab = jnp.clip(lab, 0, num_classes - 1)   # VMEM slices have no bounds check
        gath_ref[pl.ds(r, 1), :] = centers_ref[pl.ds(lab, 1), :]
        return carry

    jax.lax.fori_loop(0, tile_b, gather_row, 0, unroll=(tile_b <= 32))

    # Elementwise math in f32 regardless of input dtype (v5e has no bf16 VPU).
    x = x_ref[...].astype(jnp.float32)
    c = gath_ref[...].astype(jnp.float32)
    d = x - c
    dist = jnp.clip(jnp.sum(d * d, axis=1, keepdims=True), 1e-12, 1e12)
    _accumulate_and_write(dist, t, acc_ref, out_ref,
                          batch=batch, num_classes=num_classes, tile_b=tile_b)


def _center_loss_hbm_kernel(
    labels_ref,    # SMEM (B_pad,) int32   -- scalar prefetch
    x_ref,         # VMEM (tile_b, D)
    centers_hbm,   # HBM  (C, D)           -- memory_space=pl.ANY
    out_ref,       # VMEM (1, 1) f32
    gath_ref,      # VMEM (2, tile_b, D) scratch (double-buffered gathers)
    sem,           # DMA semaphores (2, tile_b)
    acc_ref,       # VMEM (tile_b, 1) f32 scratch
    *, batch, num_classes, tile_b,
):
    t = pl.program_id(0)
    num_tiles = pl.num_programs(0)

    def start_gathers(tile_idx, slot):
        def body(r, carry):
            lab = labels_ref[tile_idx * tile_b + r]
            lab = jnp.clip(lab, 0, num_classes - 1)
            pltpu.make_async_copy(
                centers_hbm.at[pl.ds(lab, 1), :],
                gath_ref.at[slot, pl.ds(r, 1), :],
                sem.at[slot, r],
            ).start()
            return carry
        jax.lax.fori_loop(0, tile_b, body, 0)

    def wait_gathers(slot):
        def body(r, carry):
            # Same-shape descriptor; only the semaphore / byte count matter.
            pltpu.make_async_copy(
                centers_hbm.at[pl.ds(0, 1), :],
                gath_ref.at[slot, pl.ds(r, 1), :],
                sem.at[slot, r],
            ).wait()
            return carry
        jax.lax.fori_loop(0, tile_b, body, 0)

    @pl.when(t == 0)
    def _():
        acc_ref[...] = jnp.zeros_like(acc_ref)
        start_gathers(0, 0)            # prime slot 0

    # Prefetch the NEXT tile's rows one step ahead (labels are already in
    # SMEM) and keep all scalar reads / DMA starts ahead of any wait.
    @pl.when(t + 1 < num_tiles)
    def _():
        start_gathers(t + 1, (t + 1) % 2)

    slot = t % 2
    wait_gathers(slot)

    x = x_ref[...].astype(jnp.float32)
    c = gath_ref[slot].astype(jnp.float32)
    d = x - c
    dist = jnp.clip(jnp.sum(d * d, axis=1, keepdims=True), 1e-12, 1e12)
    _accumulate_and_write(dist, t, acc_ref, out_ref,
                          batch=batch, num_classes=num_classes, tile_b=tile_b)


def center_loss(x, centers, labels):
    """Pallas-backed CenterLoss forward. Returns a scalar float32 loss."""
    B, D = x.shape
    C, Dc = centers.shape
    assert D == Dc
    # Labels must be in [0, C); clip defensively so data-dependent addressing
    # can never fault (validate upstream for semantic correctness).
    labels = jnp.clip(labels.astype(jnp.int32), 0, C - 1)

    # --- batch tiling -------------------------------------------------------
    # Small B -> single grid step; large B -> 128-row tiles; ragged B -> pad
    # (padded rows are masked inside the kernel).  Never "tile_b = B" for huge B.
    MAX_TILE_B = 128
    tile_b = min(_round_up(B, 8), MAX_TILE_B)
    b_pad = _round_up(B, tile_b)
    num_tiles = b_pad // tile_b

    if b_pad != B:
        x_p = jnp.zeros((b_pad, D), x.dtype).at[:B].set(x)
        labels_p = jnp.zeros((b_pad,), jnp.int32).at[:B].set(labels)
    else:
        x_p, labels_p = x, labels

    # --- VMEM budgeting -----------------------------------------------------
    isx = x.dtype.itemsize
    isc = centers.dtype.itemsize
    centers_bytes = C * D * isc
    pipe_bytes = 2 * tile_b * D * isx + 2 * tile_b * D * isc + (64 << 10)
    try:
        vmem_cap = int(pltpu.get_tpu_info().vmem_capacity_bytes)
    except Exception:
        vmem_cap = 64 << 20          # conservative: v7x per-core physical VMEM
    resident = (centers_bytes + pipe_bytes) <= int(vmem_cap * 0.4)
    needed = 2 * centers_bytes + 2 * pipe_bytes + (4 << 20) if resident \
        else 2 * pipe_bytes + (4 << 20)
    vmem_limit = int(min(max(needed, 32 << 20), vmem_cap))

    common = dict(batch=B, num_classes=C, tile_b=tile_b)
    if resident:
        kernel = functools.partial(_center_loss_resident_kernel, **common)
        centers_spec = pl.BlockSpec((C, D), lambda t, lab: (0, 0))  # fetched once
        scratch = [
            pltpu.VMEM((tile_b, D), centers.dtype),   # gathered center rows
            pltpu.VMEM((tile_b, 1), jnp.float32),     # vector accumulator
        ]
    else:
        kernel = functools.partial(_center_loss_hbm_kernel, **common)
        centers_spec = pl.BlockSpec(memory_space=pl.ANY)            # stays in HBM
        scratch = [
            pltpu.VMEM((2, tile_b, D), centers.dtype),  # double-buffered gathers
            pltpu.SemaphoreType.DMA((2, tile_b)),
            pltpu.VMEM((tile_b, 1), jnp.float32),
        ]

    grid_spec = pltpu.PrefetchScalarGridSpec(
        num_scalar_prefetch=1,               # labels -> SMEM
        grid=(num_tiles,),
        in_specs=[
            pl.BlockSpec((tile_b, D), lambda t, lab: (t, 0)),  # x batch tile
            centers_spec,
        ],
        out_specs=pl.BlockSpec((1, 1), lambda t, lab: (0, 0)),
        scratch_shapes=scratch,
    )

    out = pl.pallas_call(
        kernel,
        grid_spec=grid_spec,
        out_shape=jax.ShapeDtypeStruct((1, 1), jnp.float32),
        compiler_params=pltpu.CompilerParams(
            # Output / accumulator are resident across the batch-tile axis.
            dimension_semantics=("arbitrary",),
            vmem_limit_bytes=vmem_limit,
        ),
        cost_estimate=pl.CostEstimate(
            flops=3 * b_pad * D + 2 * b_pad,
            transcendentals=0,
            bytes_accessed=int(b_pad * D * isx + centers_bytes + b_pad * 4 + 4),
        ),
    )(labels_p, x_p, centers)   # native dtypes passed through, no wrapper casts
    return out[0, 0]


if __name__ == "__main__":
    # Small, deterministic setup (module: centers = randn(num_classes, feat_dim)).
    batch = 16
    feat_dim = 128
    num_classes = 32

    key = jax.random.PRNGKey(0)
    kx, kc, kl = jax.random.split(key, 3)

    centers = jax.random.normal(kc, (num_classes, feat_dim), dtype=jnp.float32)
    x = jax.random.normal(kx, (batch, feat_dim), dtype=jnp.float32)
    labels = jax.random.randint(kl, (batch,), 0, num_classes, dtype=jnp.int32)

    loss = center_loss(x, centers, labels)
    jax.block_until_ready(loss)

    # Pure-JAX reference mirroring the PyTorch expanded form.  Note: the kernel
    # uses the direct (x - c)^2 form, which is not bit-identical to the
    # expanded form; agreement is within f32 tolerance only.
    xc = jax.lax.dot_general(
        x, centers, dimension_numbers=(((1,), (1,)), ((), ())),
        precision=jax.lax.Precision.HIGHEST)
    distmat = (jnp.sum(x**2, axis=1, keepdims=True)
               + jnp.sum(centers**2, axis=1)[None, :]
               - 2.0 * xc)
    mask = (labels[:, None] == jnp.arange(num_classes)[None, :]).astype(jnp.float32)
    ref = jnp.sum(jnp.clip(distmat * mask, 1e-12, 1e12)) / batch

    assert jnp.allclose(loss, ref, rtol=1e-5, atol=1e-4), (loss, ref)
    print("KERNEL_OK")
</pallas_src>

<mosaic_0001>
module attributes {stable_mosaic.version = 11 : i64} {
  func.func @_center_loss_resident_kernel(%arg0: i32, %arg1: memref<16xi32, #tpu.memory_space<smem>>, %arg2: memref<16x128xf32, #tpu.memory_space<vmem>>, %arg3: memref<32x128xf32, #tpu.memory_space<vmem>>, %arg4: memref<1x1xf32, #tpu.memory_space<vmem>>, %arg5: memref<16x128xf32, #tpu.memory_space<vmem>>, %arg6: memref<16x1xf32, #tpu.memory_space<vmem>>) attributes {dimension_semantics = [#tpu.dimension_semantics<arbitrary>], iteration_bounds = array<i64: 1>, scalar_prefetch = 1 : i64, scratch_operands = 2 : i64, tpu.core_type = #tpu.core_type<tc>, window_params = [{transform_indices = @transform_0, window_bounds = array<i64: 16, 128>}, {pipeline_mode = #tpu.pipeline_mode<synchronous>, transform_indices = @transform_1, window_bounds = array<i64: 32, 128>}, {pipeline_mode = #tpu.pipeline_mode<synchronous>, transform_indices = @transform_2, window_bounds = array<i64: 1, 1>}]} {
    %c0_i32 = arith.constant 0 : i32
    %0 = arith.cmpi eq, %arg0, %c0_i32 : i32
    %1 = arith.extui %0 : i1 to i32
    %c0_i32_0 = arith.constant 0 : i32
    %2 = arith.cmpi ne, %1, %c0_i32_0 : i32
    scf.if %2 {
      %cst_102 = arith.constant 0.000000e+00 : f32
      %197 = vector.broadcast %cst_102 : f32 to vector<16x1xf32>
      %c0_103 = arith.constant 0 : index
      %c0_104 = arith.constant 0 : index
      %198 = vector.load %arg6[%c0_103, %c0_104] : memref<16x1xf32, #tpu.memory_space<vmem>>, vector<16x1xf32>
      tpu.vector_store %arg6[%c0_103, %c0_104], %197 {strides = array<i32>} : memref<16x1xf32, #tpu.memory_space<vmem>>, vector<16x1xf32>,
    } else {
    }
    %c0_i32_1 = arith.constant 0 : i32
    %c16_i32 = arith.constant 16 : i32
    %3 = arith.muli %arg0, %c16_i32 : i32
    %4 = arith.addi %3, %c0_i32_1 : i32
    %5 = arith.index_cast %4 : i32 to index
    %6 = memref.load %arg1[%5] : memref<16xi32, #tpu.memory_space<smem>>
    %c0_i32_2 = arith.constant 0 : i32
    %c31_i32 = arith.constant 31 : i32
    %7 = arith.maxsi %c0_i32_2, %6 : i32
    %8 = arith.minsi %c31_i32, %7 : i32
    %9 = arith.index_cast %8 : i32 to index
    %c0 = arith.constant 0 : index
    %10 = vector.load %arg3[%9, %c0] : memref<32x128xf32, #tpu.memory_space<vmem>>, vector<1x128xf32>
    %11 = arith.index_cast %c0_i32_1 : i32 to index
    %c0_3 = arith.constant 0 : index
    %12 = vector.load %arg5[%11, %c0_3] : memref<16x128xf32, #tpu.memory_space<vmem>>, vector<1x128xf32>
    tpu.vector_store %arg5[%11, %c0_3], %10 {strides = array<i32>} : memref<16x128xf32, #tpu.memory_space<vmem>>, vector<1x128xf32>,
    %c1_i32 = arith.constant 1 : i32
    %c16_i32_4 = arith.constant 16 : i32
    %13 = arith.muli %arg0, %c16_i32_4 : i32
    %14 = arith.addi %13, %c1_i32 : i32
    %15 = arith.index_cast %14 : i32 to index
    %16 = memref.load %arg1[%15] : memref<16xi32, #tpu.memory_space<smem>>
    %c0_i32_5 = arith.constant 0 : i32
    %c31_i32_6 = arith.constant 31 : i32
    %17 = arith.maxsi %c0_i32_5, %16 : i32
    %18 = arith.minsi %c31_i32_6, %17 : i32
    %19 = arith.index_cast %18 : i32 to index
    %c0_7 = arith.constant 0 : index
    %20 = vector.load %arg3[%19, %c0_7] : memref<32x128xf32, #tpu.memory_space<vmem>>, vector<1x128xf32>
    %21 = arith.index_cast %c1_i32 : i32 to index
    %c0_8 = arith.constant 0 : index
    %22 = vector.load %arg5[%21, %c0_8] : memref<16x128xf32, #tpu.memory_space<vmem>>, vector<1x128xf32>
    tpu.vector_store %arg5[%21, %c0_8], %20 {strides = array<i32>} : memref<16x128xf32, #tpu.memory_space<vmem>>, vector<1x128xf32>,
    %c2_i32 = arith.constant 2 : i32
    %c16_i32_9 = arith.constant 16 : i32
    %23 = arith.muli %arg0, %c16_i32_9 : i32
    %24 = arith.addi %23, %c2_i32 : i32
    %25 = arith.index_cast %24 : i32 to index
    %26 = memref.load %arg1[%25] : memref<16xi32, #tpu.memory_space<smem>>
    %c0_i32_10 = arith.constant 0 : i32
    %c31_i32_11 = arith.constant 31 : i32
    %27 = arith.maxsi %c0_i32_10, %26 : i32
    %28 = arith.minsi %c31_i32_11, %27 : i32
    %29 = arith.index_cast %28 : i32 to index
    %c0_12 = arith.constant 0 : index
    %30 = vector.load %arg3[%29, %c0_12] : memref<32x128xf32, #tpu.memory_space<vmem>>, vector<1x128xf32>
    %31 = arith.index_cast %c2_i32 : i32 to index
    %c0_13 = arith.constant 0 : index
    %32 = vector.load %arg5[%31, %c0_13] : memref<16x128xf32, #tpu.memory_space<vmem>>, vector<1x128xf32>
    tpu.vector_store %arg5[%31, %c0_13], %30 {strides = array<i32>} : memref<16x128xf32, #tpu.memory_space<vmem>>, vector<1x128xf32>,
    %c3_i32 = arith.constant 3 : i32
    %c16_i32_14 = arith.constant 16 : i32
    %33 = arith.muli %arg0, %c16_i32_14 : i32
    %34 = arith.addi %33, %c3_i32 : i32
    %35 = arith.index_cast %34 : i32 to index
    %36 = memref.load %arg1[%35] : memref<16xi32, #tpu.memory_space<smem>>
    %c0_i32_15 = arith.constant 0 : i32
    %c31_i32_16 = arith.constant 31 : i32
    %37 = arith.maxsi %c0_i32_15, %36 : i32
    %38 = arith.minsi %c31_i32_16, %37 : i32
    %39 = arith.index_cast %38 : i32 to index
    %c0_17 = arith.constant 0 : index
    %40 = vector.load %arg3[%39, %c0_17] : memref<32x128xf32, #tpu.memory_space<vmem>>, vector<1x128xf32>
    %41 = arith.index_cast %c3_i32 : i32 to index
    %c0_18 = arith.constant 0 : index
    %42 = vector.load %arg5[%41, %c0_18] : memref<16x128xf32, #tpu.memory_space<vmem>>, vector<1x128xf32>
    tpu.vector_store %arg5[%41, %c0_18], %40 {strides = array<i32>} : memref<16x128xf32, #tpu.memory_space<vmem>>, vector<1x128xf32>,
    %c4_i32 = arith.constant 4 : i32
    %c16_i32_19 = arith.constant 16 : i32
    %43 = arith.muli %arg0, %c16_i32_19 : i32
    %44 = arith.addi %43, %c4_i32 : i32
    %45 = arith.index_cast %44 : i32 to index
    %46 = memref.load %arg1[%45] : memref<16xi32, #tpu.memory_space<smem>>
    %c0_i32_20 = arith.constant 0 : i32
    %c31_i32_21 = arith.constant 31 : i32
    %47 = arith.maxsi %c0_i32_20, %46 : i32
    %48 = arith.minsi %c31_i32_21, %47 : i32
    %49 = arith.index_cast %48 : i32 to index
    %c0_22 = arith.constant 0 : index
    %50 = vector.load %arg3[%49, %c0_22] : memref<32x128xf32, #tpu.memory_space<vmem>>, vector<1x128xf32>
    %51 = arith.index_cast %c4_i32 : i32 to index
    %c0_23 = arith.constant 0 : index
    %52 = vector.load %arg5[%51, %c0_23] : memref<16x128xf32, #tpu.memory_space<vmem>>, vector<1x128xf32>
    tpu.vector_store %arg5[%51, %c0_23], %50 {strides = array<i32>} : memref<16x128xf32, #tpu.memory_space<vmem>>, vector<1x128xf32>,
    %c5_i32 = arith.constant 5 : i32
    %c16_i32_24 = arith.constant 16 : i32
    %53 = arith.muli %arg0, %c16_i32_24 : i32
    %54 = arith.addi %53, %c5_i32 : i32
    %55 = arith.index_cast %54 : i32 to index
    %56 = memref.load %arg1[%55] : memref<16xi32, #tpu.memory_space<smem>>
    %c0_i32_25 = arith.constant 0 : i32
    %c31_i32_26 = arith.constant 31 : i32
    %57 = arith.maxsi %c0_i32_25, %56 : i32
    %58 = arith.minsi %c31_i32_26, %57 : i32
    %59 = arith.index_cast %58 : i32 to index
    %c0_27 = arith.constant 0 : index
    %60 = vector.load %arg3[%59, %c0_27] : memref<32x128xf32, #tpu.memory_space<vmem>>, vector<1x128xf32>
    %61 = arith.index_cast %c5_i32 : i32 to index
    %c0_28 = arith.constant 0 : index
    %62 = vector.load %arg5[%61, %c0_28] : memref<16x128xf32, #tpu.memory_space<vmem>>, vector<1x128xf32>
    tpu.vector_store %arg5[%61, %c0_28], %60 {strides = array<i32>} : memref<16x128xf32, #tpu.memory_space<vmem>>, vector<1x128xf32>,
    %c6_i32 = arith.constant 6 : i32
    %c16_i32_29 = arith.constant 16 : i32
    %63 = arith.muli %arg0, %c16_i32_29 : i32
    %64 = arith.addi %63, %c6_i32 : i32
    %65 = arith.index_cast %64 : i32 to index
    %66 = memref.load %arg1[%65] : memref<16xi32, #tpu.memory_space<smem>>
    %c0_i32_30 = arith.constant 0 : i32
    %c31_i32_31 = arith.constant 31 : i32
    %67 = arith.maxsi %c0_i32_30, %66 : i32
    %68 = arith.minsi %c31_i32_31, %67 : i32
    %69 = arith.index_cast %68 : i32 to index
    %c0_32 = arith.constant 0 : index
    %70 = vector.load %arg3[%69, %c0_32] : memref<32x128xf32, #tpu.memory_space<vmem>>, vector<1x128xf32>
    %71 = arith.index_cast %c6_i32 : i32 to index
    %c0_33 = arith.constant 0 : index
    %72 = vector.load %arg5[%71, %c0_33] : memref<16x128xf32, #tpu.memory_space<vmem>>, vector<1x128xf32>
    tpu.vector_store %arg5[%71, %c0_33], %70 {strides = array<i32>} : memref<16x128xf32, #tpu.memory_space<vmem>>, vector<1x128xf32>,
    %c7_i32 = arith.constant 7 : i32
    %c16_i32_34 = arith.constant 16 : i32
    %73 = arith.muli %arg0, %c16_i32_34 : i32
    %74 = arith.addi %73, %c7_i32 : i32
    %75 = arith.index_cast %74 : i32 to index
    %76 = memref.load %arg1[%75] : memref<16xi32, #tpu.memory_space<smem>>
    %c0_i32_35 = arith.constant 0 : i32
    %c31_i32_36 = arith.constant 31 : i32
    %77 = arith.maxsi %c0_i32_35, %76 : i32
    %78 = arith.minsi %c31_i32_36, %77 : i32
    %79 = arith.index_cast %78 : i32 to index
    %c0_37 = arith.constant 0 : index
    %80 = vector.load %arg3[%79, %c0_37] : memref<32x128xf32, #tpu.memory_space<vmem>>, vector<1x128xf32>
    %81 = arith.index_cast %c7_i32 : i32 to index
    %c0_38 = arith.constant 0 : index
    %82 = vector.load %arg5[%81, %c0_38] : memref<16x128xf32, #tpu.memory_space<vmem>>, vector<1x128xf32>
    tpu.vector_store %arg5[%81, %c0_38], %80 {strides = array<i32>} : memref<16x128xf32, #tpu.memory_space<vmem>>, vector<1x128xf32>,
    %c8_i32 = arith.constant 8 : i32
    %c16_i32_39 = arith.constant 16 : i32
    %83 = arith.muli %arg0, %c16_i32_39 : i32
    %84 = arith.addi %83, %c8_i32 : i32
    %85 = arith.index_cast %84 : i32 to index
    %86 = memref.load %arg1[%85] : memref<16xi32, #tpu.memory_space<smem>>
    %c0_i32_40 = arith.constant 0 : i32
    %c31_i32_41 = arith.constant 31 : i32
    %87 = arith.maxsi %c0_i32_40, %86 : i32
    %88 = arith.minsi %c31_i32_41, %87 : i32
    %89 = arith.index_cast %88 : i32 to index
    %c0_42 = arith.constant 0 : index
    %90 = vector.load %arg3[%89, %c0_42] : memref<32x128xf32, #tpu.memory_space<vmem>>, vector<1x128xf32>
    %91 = arith.index_cast %c8_i32 : i32 to index
    %c0_43 = arith.constant 0 : index
    %92 = vector.load %arg5[%91, %c0_43] : memref<16x128xf32, #tpu.memory_space<vmem>>, vector<1x128xf32>
    tpu.vector_store %arg5[%91, %c0_43], %90 {strides = array<i32>} : memref<16x128xf32, #tpu.memory_space<vmem>>, vector<1x128xf32>,
    %c9_i32 = arith.constant 9 : i32
    %c16_i32_44 = arith.constant 16 : i32
    %93 = arith.muli %arg0, %c16_i32_44 : i32
    %94 = arith.addi %93, %c9_i32 : i32
    %95 = arith.index_cast %94 : i32 to index
    %96 = memref.load %arg1[%95] : memref<16xi32, #tpu.memory_space<smem>>
    %c0_i32_45 = arith.constant 0 : i32
    %c31_i32_46 = arith.constant 31 : i32
    %97 = arith.maxsi %c0_i32_45, %96 : i32
    %98 = arith.minsi %c31_i32_46, %97 : i32
    %99 = arith.index_cast %98 : i32 to index
    %c0_47 = arith.constant 0 : index
    %100 = vector.load %arg3[%99, %c0_47] : memref<32x128xf32, #tpu.memory_space<vmem>>, vector<1x128xf32>
    %101 = arith.index_cast %c9_i32 : i32 to index
    %c0_48 = arith.constant 0 : index
    %102 = vector.load %arg5[%101, %c0_48] : memref<16x128xf32, #tpu.memory_space<vmem>>, vector<1x128xf32>
    tpu.vector_store %arg5[%101, %c0_48], %100 {strides = array<i32>} : memref<16x128xf32, #tpu.memory_space<vmem>>, vector<1x128xf32>,
    %c10_i32 = arith.constant 10 : i32
    %c16_i32_49 = arith.constant 16 : i32
    %103 = arith.muli %arg0, %c16_i32_49 : i32
    %104 = arith.addi %103, %c10_i32 : i32
    %105 = arith.index_cast %104 : i32 to index
    %106 = memref.load %arg1[%105] : memref<16xi32, #tpu.memory_space<smem>>
    %c0_i32_50 = arith.constant 0 : i32
    %c31_i32_51 = arith.constant 31 : i32
    %107 = arith.maxsi %c0_i32_50, %106 : i32
    %108 = arith.minsi %c31_i32_51, %107 : i32
    %109 = arith.index_cast %108 : i32 to index
    %c0_52 = arith.constant 0 : index
    %110 = vector.load %arg3[%109, %c0_52] : memref<32x128xf32, #tpu.memory_space<vmem>>, vector<1x128xf32>
    %111 = arith.index_cast %c10_i32 : i32 to index
    %c0_53 = arith.constant 0 : index
    %112 = vector.load %arg5[%111, %c0_53] : memref<16x128xf32, #tpu.memory_space<vmem>>, vector<1x128xf32>
    tpu.vector_store %arg5[%111, %c0_53], %110 {strides = array<i32>} : memref<16x128xf32, #tpu.memory_space<vmem>>, vector<1x128xf32>,
    %c11_i32 = arith.constant 11 : i32
    %c16_i32_54 = arith.constant 16 : i32
    %113 = arith.muli %arg0, %c16_i32_54 : i32
    %114 = arith.addi %113, %c11_i32 : i32
    %115 = arith.index_cast %114 : i32 to index
    %116 = memref.load %arg1[%115] : memref<16xi32, #tpu.memory_space<smem>>
    %c0_i32_55 = arith.constant 0 : i32
    %c31_i32_56 = arith.constant 31 : i32
    %117 = arith.maxsi %c0_i32_55, %116 : i32
    %118 = arith.minsi %c31_i32_56, %117 : i32
    %119 = arith.index_cast %118 : i32 to index
    %c0_57 = arith.constant 0 : index
    %120 = vector.load %arg3[%119, %c0_57] : memref<32x128xf32, #tpu.memory_space<vmem>>, vector<1x128xf32>
    %121 = arith.index_cast %c11_i32 : i32 to index
    %c0_58 = arith.constant 0 : index
    %122 = vector.load %arg5[%121, %c0_58] : memref<16x128xf32, #tpu.memory_space<vmem>>, vector<1x128xf32>
    tpu.vector_store %arg5[%121, %c0_58], %120 {strides = array<i32>} : memref<16x128xf32, #tpu.memory_space<vmem>>, vector<1x128xf32>,
    %c12_i32 = arith.constant 12 : i32
    %c16_i32_59 = arith.constant 16 : i32
    %123 = arith.muli %arg0, %c16_i32_59 : i32
    %124 = arith.addi %123, %c12_i32 : i32
    %125 = arith.index_cast %124 : i32 to index
    %126 = memref.load %arg1[%125] : memref<16xi32, #tpu.memory_space<smem>>
    %c0_i32_60 = arith.constant 0 : i32
    %c31_i32_61 = arith.constant 31 : i32
    %127 = arith.maxsi %c0_i32_60, %126 : i32
    %128 = arith.minsi %c31_i32_61, %127 : i32
    %129 = arith.index_cast %128 : i32 to index
    %c0_62 = arith.constant 0 : index
    %130 = vector.load %arg3[%129, %c0_62] : memref<32x128xf32, #tpu.memory_space<vmem>>, vector<1x128xf32>
    %131 = arith.index_cast %c12_i32 : i32 to index
    %c0_63 = arith.constant 0 : index
    %132 = vector.load %arg5[%131, %c0_63] : memref<16x128xf32, #tpu.memory_space<vmem>>, vector<1x128xf32>
    tpu.vector_store %arg5[%131, %c0_63], %130 {strides = array<i32>} : memref<16x128xf32, #tpu.memory_space<vmem>>, vector<1x128xf32>,
    %c13_i32 = arith.constant 13 : i32
    %c16_i32_64 = arith.constant 16 : i32
    %133 = arith.muli %arg0, %c16_i32_64 : i32
    %134 = arith.addi %133, %c13_i32 : i32
    %135 = arith.index_cast %134 : i32 to index
    %136 = memref.load %arg1[%135] : memref<16xi32, #tpu.memory_space<smem>>
    %c0_i32_65 = arith.constant 0 : i32
    %c31_i32_66 = arith.constant 31 : i32
    %137 = arith.maxsi %c0_i32_65, %136 : i32
    %138 = arith.minsi %c31_i32_66, %137 : i32
    %139 = arith.index_cast %138 : i32 to index
    %c0_67 = arith.constant 0 : index
    %140 = vector.load %arg3[%139, %c0_67] : memref<32x128xf32, #tpu.memory_space<vmem>>, vector<1x128xf32>
    %141 = arith.index_cast %c13_i32 : i32 to index
    %c0_68 = arith.constant 0 : index
    %142 = vector.load %arg5[%141, %c0_68] : memref<16x128xf32, #tpu.memory_space<vmem>>, vector<1x128xf32>
    tpu.vector_store %arg5[%141, %c0_68], %140 {strides = array<i32>} : memref<16x128xf32, #tpu.memory_space<vmem>>, vector<1x128xf32>,
    %c14_i32 = arith.constant 14 : i32
    %c16_i32_69 = arith.constant 16 : i32
    %143 = arith.muli %arg0, %c16_i32_69 : i32
    %144 = arith.addi %143, %c14_i32 : i32
    %145 = arith.index_cast %144 : i32 to index
    %146 = memref.load %arg1[%145] : memref<16xi32, #tpu.memory_space<smem>>
    %c0_i32_70 = arith.constant 0 : i32
    %c31_i32_71 = arith.constant 31 : i32
    %147 = arith.maxsi %c0_i32_70, %146 : i32
    %148 = arith.minsi %c31_i32_71, %147 : i32
    %149 = arith.index_cast %148 : i32 to index
    %c0_72 = arith.constant 0 : index
    %150 = vector.load %arg3[%149, %c0_72] : memref<32x128xf32, #tpu.memory_space<vmem>>, vector<1x128xf32>
    %151 = arith.index_cast %c14_i32 : i32 to index
    %c0_73 = arith.constant 0 : index
    %152 = vector.load %arg5[%151, %c0_73] : memref<16x128xf32, #tpu.memory_space<vmem>>, vector<1x128xf32>
    tpu.vector_store %arg5[%151, %c0_73], %150 {strides = array<i32>} : memref<16x128xf32, #tpu.memory_space<vmem>>, vector<1x128xf32>,
    %c15_i32 = arith.constant 15 : i32
    %c16_i32_74 = arith.constant 16 : i32
    %153 = arith.muli %arg0, %c16_i32_74 : i32
    %154 = arith.addi %153, %c15_i32 : i32
    %155 = arith.index_cast %154 : i32 to index
    %156 = memref.load %arg1[%155] : memref<16xi32, #tpu.memory_space<smem>>
    %c0_i32_75 = arith.constant 0 : i32
    %c31_i32_76 = arith.constant 31 : i32
    %157 = arith.maxsi %c0_i32_75, %156 : i32
    %158 = arith.minsi %c31_i32_76, %157 : i32
    %159 = arith.index_cast %158 : i32 to index
    %c0_77 = arith.constant 0 : index
    %160 = vector.load %arg3[%159, %c0_77] : memref<32x128xf32, #tpu.memory_space<vmem>>, vector<1x128xf32>
    %161 = arith.index_cast %c15_i32 : i32 to index
    %c0_78 = arith.constant 0 : index
    %162 = vector.load %arg5[%161, %c0_78] : memref<16x128xf32, #tpu.memory_space<vmem>>, vector<1x128xf32>
    tpu.vector_store %arg5[%161, %c0_78], %160 {strides = array<i32>} : memref<16x128xf32, #tpu.memory_space<vmem>>, vector<1x128xf32>,
    %c16_i32_79 = arith.constant 16 : i32
    %c0_80 = arith.constant 0 : index
    %c0_81 = arith.constant 0 : index
    %163 = vector.load %arg2[%c0_80, %c0_81] : memref<16x128xf32, #tpu.memory_space<vmem>>, vector<16x128xf32>
    %c0_82 = arith.constant 0 : index
    %c0_83 = arith.constant 0 : index
    %164 = vector.load %arg5[%c0_82, %c0_83] : memref<16x128xf32, #tpu.memory_space<vmem>>, vector<16x128xf32>
    %165 = arith.subf %163, %164 : vector<16x128xf32>
    %166 = arith.mulf %165, %165 : vector<16x128xf32>
    %cst = arith.constant dense<0.000000e+00> : vector<16xf32>
    %167 = vector.multi_reduction <add>, %166, %cst [1] : vector<16x128xf32> to vector<16xf32>
    %168 = vector.shape_cast %167 : vector<16xf32> to vector<16x1xf32>
    %cst_84 = arith.constant 9.99999996E-13 : f32
    %cst_85 = arith.constant 9.99999995E+11 : f32
    %169 = vector.broadcast %cst_84 : f32 to vector<16x1xf32>
    %170 = arith.maximumf %169, %168 : vector<16x1xf32>
    %171 = vector.broadcast %cst_85 : f32 to vector<16x1xf32>
    %172 = arith.minimumf %171, %170 : vector<16x1xf32>
    %c16_i32_86 = arith.constant 16 : i32
    %173 = arith.muli %arg0, %c16_i32_86 : i32
    %174 = tpu.iota {dimensions = array<i32: 0>} : vector<16x1xi32>
    %175 = vector.broadcast %173 : i32 to vector<16x1xi32>
    %176 = arith.addi %175, %174 : vector<16x1xi32>
    %c16_i32_87 = arith.constant 16 : i32
    %177 = vector.broadcast %c16_i32_87 : i32 to vector<16x1xi32>
    %178 = arith.cmpi slt, %176, %177 : vector<16x1xi32>
    %cst_88 = arith.constant 0.000000e+00 : f32
    %179 = vector.broadcast %cst_88 : f32 to vector<16x1xf32>
    %180 = arith.select %178, %172, %179 : vector<16x1xi1>, vector<16x1xf32>
    %c0_89 = arith.constant 0 : index
    %c0_90 = arith.constant 0 : index
    %181 = vector.load %arg6[%c0_89, %c0_90] : memref<16x1xf32, #tpu.memory_space<vmem>>, vector<16x1xf32>
    %182 = arith.addf %181, %180 : vector<16x1xf32>
    %c0_91 = arith.constant 0 : index
    %c0_92 = arith.constant 0 : index
    %183 = vector.load %arg6[%c0_91, %c0_92] : memref<16x1xf32, #tpu.memory_space<vmem>>, vector<16x1xf32>
    tpu.vector_store %arg6[%c0_91, %c0_92], %182 {strides = array<i32>} : memref<16x1xf32, #tpu.memory_space<vmem>>, vector<16x1xf32>,
    %cst_93 = arith.constant 1.600000e+01 : f32
    %cst_94 = arith.constant 3.100000e+01 : f32
    %184 = arith.mulf %cst_93, %cst_94 : f32
    %cst_95 = arith.constant 9.99999996E-13 : f32
    %185 = arith.mulf %184, %cst_95 : f32
    %c0_96 = arith.constant 0 : index
    %c0_97 = arith.constant 0 : index
    %186 = vector.load %arg6[%c0_96, %c0_97] : memref<16x1xf32, #tpu.memory_space<vmem>>, vector<16x1xf32>
    %187 = vector.shape_cast %186 : vector<16x1xf32> to vector<1x16x1xf32>
    %cst_98 = arith.constant dense<0.000000e+00> : vector<1xf32>
    %188 = vector.multi_reduction <add>, %187, %cst_98 [1, 2] : vector<1x16x1xf32> to vector<1xf32>
    %189 = vector.shape_cast %188 : vector<1xf32> to vector<1x1x1xf32>
    %190 = vector.extract %189[0, 0, 0] : f32 from vector<1x1x1xf32>
    %191 = vector.broadcast %190 : f32 to vector<1x1xf32>
    %192 = vector.broadcast %185 : f32 to vector<1x1xf32>
    %193 = arith.addf %191, %192 : vector<1x1xf32>
    %cst_99 = arith.constant 1.600000e+01 : f32
    %194 = vector.broadcast %cst_99 : f32 to vector<1x1xf32>
    %195 = arith.divf %193, %194 : vector<1x1xf32>
    %c0_100 = arith.constant 0 : index
    %c0_101 = arith.constant 0 : index
    %196 = vector.load %arg4[%c0_100, %c0_101] : memref<1x1xf32, #tpu.memory_space<vmem>>, vector<1x1xf32>
    tpu.vector_store %arg4[%c0_100, %c0_101], %195 {strides = array<i32>} : memref<1x1xf32, #tpu.memory_space<vmem>>, vector<1x1xf32>,
    return
  }
  func.func @transform_0(%arg0: i32, %arg1: memref<16xi32, #tpu.memory_space<smem>>) -> (i32, i32) {
    %c0_i32 = arith.constant 0 : i32
    %c0_i32_0 = arith.constant 0 : i32
    return %arg0, %c0_i32 : i32, i32
  }
  func.func @transform_1(%arg0: i32, %arg1: memref<16xi32, #tpu.memory_space<smem>>) -> (i32, i32) {
    %c0_i32 = arith.constant 0 : i32
    %c0_i32_0 = arith.constant 0 : i32
    %c0_i32_1 = arith.constant 0 : i32
    return %c0_i32, %c0_i32_0 : i32, i32
  }
  func.func @transform_2(%arg0: i32, %arg1: memref<16xi32, #tpu.memory_space<smem>>) -> (i32, i32) {
    %c0_i32 = arith.constant 0 : i32
    %c0_i32_0 = arith.constant 0 : i32
    %c0_i32_1 = arith.constant 0 : i32
    return %c0_i32, %c0_i32_0 : i32, i32
  }
}

</mosaic_0001>

<llo_original>
// kernel: tpu_custom_call.1
$region0: #{tpu_custom_call.1}
  #allocation0 [shape = 'u32[]', space=smem, size = 0x4, offset = 0x4, fixed_abs, tag = 'smem constant byte address 0x4 - core index']
  #allocation1 [shape = 'u32[144,128]{1,0:T(1,128)}', space=vmem, size = 0x12000, scoped, tag = 'internal scratch']
  #allocation2 [shape = 'f32[16,128]{1,0:T(8,128)}', space=vmem, size = 0x2000, scoped, tag = 'scratch operand']
  #allocation3 [shape = 'f32[16,1]{1,0:T(8,128)}', space=vmem, size = 0x2000, scoped, tag = 'scratch operand']
  #allocation4 [shape = 's32[1]{0}', space=sflag, size = 0x4, scoped, tag = 'scoped memory for tpu_custom_call.1']
  #allocation5 [shape = 'u8[512]{0}', space=smem, size = 0x200, scoped, tag = 'prefetched SMEM operand 0']
  %s0 = inlined_call_operand.hbm [shape: s32[16], index: 0, kind: input, shape index: {}]
  %s1 = inlined_call_operand.hbm [shape: f32[16,128], index: 1, kind: input, shape index: {}]
  %s2 = inlined_call_operand.hbm [shape: f32[32,128], index: 2, kind: input, shape index: {}]
  %s3 = inlined_call_operand.hbm [shape: f32[1,1], index: 3, kind: output, shape index: {}]
  %s4 = sld [smem:[#allocation0]]
  $region30: #{tpu_custom_call.1} parent=0
    _
  %s6 = ssub.s32 1, %s4
  %s7 = scalar_select 0, %s6, %s4
  %9 = dma.hbm_to_smem %s0, 16, [#allocation5], [#allocation4]
  %10 = dma.done [#allocation4], 16
  %11 = sfence
  $region1: #{tpu_custom_call.1} parent=0
    #allocation6 [shape = 'u8[8192]{0}', space=vmem, size = 0x2000, scoped, tag = 'input window, operand 1, single buffered']
    #allocation7 [shape = 's32[1]{0}', space=sflag, size = 0x4, scoped, tag = 'scoped memory for tpu_custom_call.1']
    #allocation8 [shape = 's32[1]{0}', space=sflag, size = 0x4, scoped, tag = 'scoped memory for tpu_custom_call.1']
    #allocation9 [shape = 'u8[16384]{0}', space=vmem, size = 0x4000, scoped, tag = 'input window, operand 2, single buffered']
    #allocation10 [shape = 's32[1]{0}', space=sflag, size = 0x4, scoped, tag = 'scoped memory for tpu_custom_call.1']
    #allocation11 [shape = 'u8[512]{0}', space=vmem, size = 0x400, scoped, tag = 'output window, operand 0, single buffered']
    %12 = vsyncpa [#allocation7], 0
    %13 = vsyncpa [#allocation10], 0
    %14 = vsyncpa [#allocation8], 0
    // Predicated region
    $region2: #{tpu_custom_call.1} parent=1 // pred_check
      _
    $region3: #{tpu_custom_call.1} parent=1 // pred_check_branch
      %16 = sbr.rel (0) target = $region5
    $region4: #{tpu_custom_call.1} parent=1 // pred_region
      %s18 = ssub.s32 256, 256
      %19 = vsyncadd [#allocation7], %s18
      %s20 = sshll.u32 [#allocation6], 4
      %s21 = int_to_ptr.vmem [resolvable:$true] %s20
      %26 = dma.hbm_to_vmem [thread:$0]  %s1, 256, %s21, [#allocation7], 128, 128, 8
    $region5: #{tpu_custom_call.1} parent=1 // pred_fallthru
      _
    // Predicated region
    $region6: #{tpu_custom_call.1} parent=1 // pred_check
      _
    $region7: #{tpu_custom_call.1} parent=1 // pred_check_branch
      %28 = sbr.rel (0) target = $region9
    $region8: #{tpu_custom_call.1} parent=1 // pred_region
      %s30 = ssub.s32 512, 512
      %31 = vsyncadd [#allocation10], %s30
      %s32 = sshll.u32 [#allocation9], 4
      %s33 = int_to_ptr.vmem [resolvable:$true] %s32
      %38 = dma.hbm_to_vmem [thread:$0]  %s2, 512, %s33, [#allocation10], 128, 128, 8
    $region9: #{tpu_custom_call.1} parent=1 // pred_fallthru
      _
    // Predicated region
    $region10: #{tpu_custom_call.1} parent=1 // pred_check
      _
    $region11: #{tpu_custom_call.1} parent=1 // pred_check_branch
      %40 = sbr.rel (0) target = $region13
    $region12: #{tpu_custom_call.1} parent=1 // pred_region
      %41 = dma.done [#allocation7], 256
    $region13: #{tpu_custom_call.1} parent=1 // pred_fallthru
      _
    // Predicated region
    $region14: #{tpu_custom_call.1} parent=1 // pred_check
      _
    $region15: #{tpu_custom_call.1} parent=1 // pred_check_branch
      %43 = sbr.rel (0) target = $region17
    $region16: #{tpu_custom_call.1} parent=1 // pred_region
      %44 = dma.done [#allocation10], 512
    $region17: #{tpu_custom_call.1} parent=1 // pred_fallthru
      _
    %p45 = scmp.eq.s32.totalorder 0, 0
    // Predicated region
    $region18: #{tpu_custom_call.1} parent=1 // pred_check
      %p46 = pneg %p45
    $region19: #{tpu_custom_call.1} parent=1 // pred_check_branch
      %48 = sbr.rel (%p46) target = $region21
    $region20: #{tpu_custom_call.1} parent=1 // pred_region
      %vm49 = vcmask 7168
      %50 = vst.msk [vmem:[#allocation3] sm:$0xff] %vm49, 0.0
      %51 = vst.msk [vmem:[#allocation3 + $0x8] sm:$0xff] %vm49, 0.0
    $region21: #{tpu_custom_call.1} parent=1 // pred_fallthru
      _
    %s52 = smul.u32 0, 16
    %s53 = sld [smem:[#allocation5 + %s52]]
    %p54 = scmp.gt.s32.totalorder %s53, 0
    %s55 = scalar_select %p54, %s53, 0
    %p56 = scmp.lt.s32.totalorder %s55, 31
    %s57 = scalar_select %p56, %s55, 31
    %s58 = scalar_lea.vmem [#allocation9], %s57
    %v59 = vld [vmem:[%s58] sm:$0x1]
    %60 = vst [vmem:[#allocation2] sm:$0x1] %v59
    %s61 = sadd.s32 %s52, 1
    %s62 = sld [smem:[#allocation5 + %s61]]
    %p63 = scmp.gt.s32.totalorder %s62, 0
    %s64 = scalar_select %p63, %s62, 0
    %p65 = scmp.lt.s32.totalorder %s64, 31
    %s66 = scalar_select %p65, %s64, 31
    %s67 = scalar_lea.vmem [#allocation9], %s66
    %v68 = vld [vmem:[%s67] sm:$0x1]
    %69 = vst [vmem:[#allocation2 + $0x1] sm:$0x1] %v68
    %s70 = sadd.s32 %s52, 2
    %s71 = sld [smem:[#allocation5 + %s70]]
    %p72 = scmp.gt.s32.totalorder %s71, 0
    %s73 = scalar_select %p72, %s71, 0
    %p74 = scmp.lt.s32.totalorder %s73, 31
    %s75 = scalar_select %p74, %s73, 31
    %s76 = scalar_lea.vmem [#allocation9], %s75
    %v77 = vld [vmem:[%s76] sm:$0x1]
    %78 = vst [vmem:[#allocation2 + $0x2] sm:$0x1] %v77
    %s79 = sadd.s32 %s52, 3
    %s80 = sld [smem:[#allocation5 + %s79]]
    %p81 = scmp.gt.s32.totalorder %s80, 0
    %s82 = scalar_select %p81, %s80, 0
    %p83 = scmp.lt.s32.totalorder %s82, 31
    %s84 = scalar_select %p83, %s82, 31
    %s85 = scalar_lea.vmem [#allocation9], %s84
    %v86 = vld [vmem:[%s85] sm:$0x1]
    %87 = vst [vmem:[#allocation2 + $0x3] sm:$0x1] %v86
    %s88 = sadd.s32 %s52, 4
    %s89 = sld [smem:[#allocation5 + %s88]]
    %p90 = scmp.gt.s32.totalorder %s89, 0
    %s91 = scalar_select %p90, %s89, 0
    %p92 = scmp.lt.s32.totalorder %s91, 31
    %s93 = scalar_select %p92, %s91, 31
    %s94 = scalar_lea.vmem [#allocation9], %s93
    %v95 = vld [vmem:[%s94] sm:$0x1]
    %96 = vst [vmem:[#allocation2 + $0x4] sm:$0x1] %v95
    %s97 = sadd.s32 %s52, 5
    %s98 = sld [smem:[#allocation5 + %s97]]
    %p99 = scmp.gt.s32.totalorder %s98, 0
    %s100 = scalar_select %p99, %s98, 0
    %p101 = scmp.lt.s32.totalorder %s100, 31
    %s102 = scalar_select %p101, %s100, 31
    %s103 = scalar_lea.vmem [#allocation9], %s102
    %v104 = vld [vmem:[%s103] sm:$0x1]
    %105 = vst [vmem:[#allocation2 + $0x5] sm:$0x1] %v104
    %s106 = sadd.s32 %s52, 6
    %s107 = sld [smem:[#allocation5 + %s106]]
    %p108 = scmp.gt.s32.totalorder %s107, 0
    %s109 = scalar_select %p108, %s107, 0
    %p110 = scmp.lt.s32.totalorder %s109, 31
    %s111 = scalar_select %p110, %s109, 31
    %s112 = scalar_lea.vmem [#allocation9], %s111
    %v113 = vld [vmem:[%s112] sm:$0x1]
    %114 = vst [vmem:[#allocation2 + $0x6] sm:$0x1] %v113
    %s115 = sadd.s32 %s52, 7
    %s116 = sld [smem:[#allocation5 + %s115]]
    %p117 = scmp.gt.s32.totalorder %s116, 0
    %s118 = scalar_select %p117, %s116, 0
    %p119 = scmp.lt.s32.totalorder %s118, 31
    %s120 = scalar_select %p119, %s118, 31
    %s121 = scalar_lea.vmem [#allocation9], %s120
    %v122 = vld [vmem:[%s121] sm:$0x1]
    %123 = vst [vmem:[#allocation2 + $0x7] sm:$0x1] %v122
    %s124 = sadd.s32 %s52, 8
    %s125 = sld [smem:[#allocation5 + %s124]]
    %p126 = scmp.gt.s32.totalorder %s125, 0
    %s127 = scalar_select %p126, %s125, 0
    %p128 = scmp.lt.s32.totalorder %s127, 31
    %s129 = scalar_select %p128, %s127, 31
    %s130 = scalar_lea.vmem [#allocation9], %s129
    %v131 = vld [vmem:[%s130] sm:$0x1]
    %132 = vst [vmem:[#allocation2 + $0x8] sm:$0x1] %v131
    %s133 = sadd.s32 %s52, 9
    %s134 = sld [smem:[#allocation5 + %s133]]
    %p135 = scmp.gt.s32.totalorder %s134, 0
    %s136 = scalar_select %p135, %s134, 0
    %p137 = scmp.lt.s32.totalorder %s136, 31
    %s138 = scalar_select %p137, %s136, 31
    %s139 = scalar_lea.vmem [#allocation9], %s138
    %v140 = vld [vmem:[%s139] sm:$0x1]
    %141 = vst [vmem:[#allocation2 + $0x9] sm:$0x1] %v140
    %s142 = sadd.s32 %s52, 10
    %s143 = sld [smem:[#allocation5 + %s142]]
    %p144 = scmp.gt.s32.totalorder %s143, 0
    %s145 = scalar_select %p144, %s143, 0
    %p146 = scmp.lt.s32.totalorder %s145, 31
    %s147 = scalar_select %p146, %s145, 31
    %s148 = scalar_lea.vmem [#allocation9], %s147
    %v149 = vld [vmem:[%s148] sm:$0x1]
    %150 = vst [vmem:[#allocation2 + $0xa] sm:$0x1] %v149
    %s151 = sadd.s32 %s52, 11
    %s152 = sld [smem:[#allocation5 + %s151]]
    %p153 = scmp.gt.s32.totalorder %s152, 0
    %s154 = scalar_select %p153, %s152, 0
    %p155 = scmp.lt.s32.totalorder %s154, 31
    %s156 = scalar_select %p155, %s154, 31
    %s157 = scalar_lea.vmem [#allocation9], %s156
    %v158 = vld [vmem:[%s157] sm:$0x1]
    %159 = vst [vmem:[#allocation2 + $0xb] sm:$0x1] %v158
    %s160 = sadd.s32 %s52, 12
    %s161 = sld [smem:[#allocation5 + %s160]]
    %p162 = scmp.gt.s32.totalorder %s161, 0
    %s163 = scalar_select %p162, %s161, 0
    %p164 = scmp.lt.s32.totalorder %s163, 31
    %s165 = scalar_select %p164, %s163, 31
    %s166 = scalar_lea.vmem [#allocation9], %s165
    %v167 = vld [vmem:[%s166] sm:$0x1]
    %168 = vst [vmem:[#allocation2 + $0xc] sm:$0x1] %v167
    %s169 = sadd.s32 %s52, 13
    %s170 = sld [smem:[#allocation5 + %s169]]
    %p171 = scmp.gt.s32.totalorder %s170, 0
    %s172 = scalar_select %p171, %s170, 0
    %p173 = scmp.lt.s32.totalorder %s172, 31
    %s174 = scalar_select %p173, %s172, 31
    %s175 = scalar_lea.vmem [#allocation9], %s174
    %v176 = vld [vmem:[%s175] sm:$0x1]
    %177 = vst [vmem:[#allocation2 + $0xd] sm:$0x1] %v176
    %s178 = sadd.s32 %s52, 14
    %s179 = sld [smem:[#allocation5 + %s178]]
    %p180 = scmp.gt.s32.totalorder %s179, 0
    %s181 = scalar_select %p180, %s179, 0
    %p182 = scmp.lt.s32.totalorder %s181, 31
    %s183 = scalar_select %p182, %s181, 31
    %s184 = scalar_lea.vmem [#allocation9], %s183
    %v185 = vld [vmem:[%s184] sm:$0x1]
    %186 = vst [vmem:[#allocation2 + $0xe] sm:$0x1] %v185
    %s187 = sadd.s32 %s52, 15
    %s188 = sld [smem:[#allocation5 + %s187]]
    %p189 = scmp.gt.s32.totalorder %s188, 0
    %s190 = scalar_select %p189, %s188, 0
    %p191 = scmp.lt.s32.totalorder %s190, 31
    %s192 = scalar_select %p191, %s190, 31
    %s193 = scalar_lea.vmem [#allocation9], %s192
    %v194 = vld [vmem:[%s193] sm:$0x1]
    %195 = vst [vmem:[#allocation2 + $0xf] sm:$0x1] %v194
    %v196 = vld [vmem:[#allocation6] sm:$0xff]
    %v197 = vld [vmem:[#allocation6 + $0x8] sm:$0xff]
    %v198 = vld [vmem:[#allocation2] sm:$0xff]
    %v199 = vld [vmem:[#allocation2 + $0x8] sm:$0xff]
    %v200 = vsub.f32 %v196, %v198
    %v201 = vsub.f32 %v197, %v199
    %v202 = vmul.f32 %v200, %v200
    %v203 = vmul.f32 %v201, %v201
    %204 = vadd.xlane.f32.xlu0 %v202
    %v205 = vpop.xlane.xlu0 %204
    %206 = vadd.xlane.f32.xlu0 %v203
    %v207 = vpop.xlane.xlu0 %206
    %v208 = vmax.f32 %v205, 1e-12
    %v209 = vmax.f32 %v207, 1e-12
    %v210 = vmin.f32 %v208, 1e+12
    %v211 = vmin.f32 %v209, 1e+12
    %v212 = vlaneseq
    %v213 = vshrl.u32 %v212, 7
    %v214 = vadd.s32 %v213, 8
    %v215 = vstv %s52
    %v216 = vadd.s32 %v215, %v213
    %v217 = vadd.s32 %v215, %v214
    %vm218 = vcmp.lt.s32.totalorder %v216, 16
    %vm219 = vcmp.lt.s32.totalorder %v217, 16
    %v220 = vsel %vm218, %v210, 0.0
    %v221 = vsel %vm219, %v211, 0.0
    %v222 = vld [vmem:[#allocation3] sm:$0xff]
    %v223 = vld [vmem:[#allocation3 + $0x8] sm:$0xff]
    %v224 = vadd.f32 %v222, %v220
    %v225 = vadd.f32 %v223, %v221
    %vm226 = vcmask 7168
    %227 = vst.msk [vmem:[#allocation3] sm:$0xff] %vm226, %v224
    %228 = vst.msk [vmem:[#allocation3 + $0x8] sm:$0xff] %vm226, %v225
    %v229 = vld [vmem:[#allocation3] sm:$0xff]
    %v230 = vld [vmem:[#allocation3 + $0x8] sm:$0xff]
    %v231 = vsel %vm226, %v229, 0.0
    %v232 = vsel %vm226, %v230, 0.0
    %v233 = vadd.f32 %v231, %v232
    %234 = vadd.xlane.f32.xlu0 %v233
    %v235 = vpop.xlane.xlu0 %234
    %v236 = vrot.slane %v235, 4
    %v237 = vadd.f32 %v235, %v236
    %v238 = vrot.slane %v237, 2
    %v239 = vadd.f32 %v237, %v238
    %v240 = vrot.slane %v239, 1
    %v241 = vadd.f32 %v239, %v240
    %s242 = vtos %v241
    %v243 = vstv %s242
    %v244 = vadd.f32 %v243, 4.96e-10
    %v245 = vrcp.pop 16.0
    %v246 = vmul.f32 %v244, %v245
    %vm247 = vcmask 0
    %248 = vst.msk [vmem:[#allocation11] sm:$0x1] %vm247, %v246
    // Predicated region
    $region22: #{tpu_custom_call.1} parent=1 // pred_check
      _
    $region23: #{tpu_custom_call.1} parent=1 // pred_check_branch
      %250 = sbr.rel (0) target = $region25
    $region24: #{tpu_custom_call.1} parent=1 // pred_region
      %s252 = ssub.s32 16, 16
      %253 = vsyncadd [#allocation8], %s252
      %s255 = sshll.u32 [#allocation11], 4
      %s256 = int_to_ptr.vmem [resolvable:$true] %s255
      %258 = dma.vmem_to_hbm [thread:$0]  %s256, 16, %s3, [#allocation8]
    $region25: #{tpu_custom_call.1} parent=1 // pred_fallthru
      _
    // Predicated region
    $region26: #{tpu_custom_call.1} parent=1 // pred_check
      _
    $region27: #{tpu_custom_call.1} parent=1 // pred_check_branch
      %260 = sbr.rel (0) target = $region29
    $region28: #{tpu_custom_call.1} parent=1 // pred_region
      %261 = dma.done [#allocation8], 16
    $region29: #{tpu_custom_call.1} parent=1 // pred_fallthru
      _
    %262 = vsyncpa [#allocation7], 1
    %263 = vsyncpa [#allocation10], 1
    %264 = vsyncpa [#allocation8], 1

</llo_original>
